<compile_context>
chip_gen: v7x
topology: tpu7x:2x2x1
jax: 0.10.0
libtpu: 0.0.40
codegen_flags: <defaults>
</compile_context>

<pallas_src>
import functools

import jax
import jax.numpy as jnp
from jax.experimental import pallas as pl
from jax.experimental.pallas import tpu as pltpu

_LANE = 128
_SUBLANE = 8


def _round_up(x, m):
    return ((x + m - 1) // m) * m


def _fused_mlp_kernel(*refs, out_widths, cast_to):
    """One batch tile through the whole MLP; all weights/biases are VMEM-resident.

    refs = (x_ref, w0_ref, ..., w{L-1}_ref, bias_packed_ref, o_ref)
    """
    num_layers = len(out_widths)
    x_ref = refs[0]
    w_refs = refs[1:1 + num_layers]
    b_ref = refs[1 + num_layers]            # (num_layers, 1, fo_max) packed biases, f32
    o_ref = refs[2 + num_layers]

    h = x_ref[...].astype(jnp.float32)
    for i in range(num_layers):
        lhs = h if cast_to is None else h.astype(cast_to)
        h = jnp.dot(lhs, w_refs[i][...], preferred_element_type=jnp.float32)
        h = h + b_ref[i][:, :out_widths[i]]          # (1, fo_i) broadcasts over rows, f32
        if i != num_layers - 1:
            h = jnp.maximum(h, 0.0)                  # ReLU on the f32 accumulator
        # TODO(synk): training-mode Dropout would use pltpu.prng_seed + stateful_bernoulli.
    o_ref[...] = h.astype(o_ref.dtype)               # single cast at the final store


def _tpu_vmem_capacity_bytes():
    try:
        return int(pltpu.get_tpu_info().vmem_capacity_bytes)
    except Exception:
        return 64 * 1024 * 1024          # conservative (v7x-sized) fallback


def _choose_batch_tiling(batch, tm_cap):
    """Pad batch only to the 8-row sublane tile and pick a batch tile size tm."""
    b8 = _round_up(batch, _SUBLANE)
    if b8 <= 2 * tm_cap:
        if b8 >= 128:
            # >= 2 tiles so ("parallel",) gives both v7x TensorCores a batch tile.
            tm = _round_up(-(-b8 // 2), _SUBLANE)
        else:
            tm = b8
    else:
        tm = _SUBLANE
        for cand in (512, 256, 128, 64, 32, 16, 8):
            if cand > tm_cap:
                continue
            if (_round_up(b8, cand) - b8) * 8 <= b8:   # <= 12.5% padded rows
                tm = cand
                break
    return tm, _round_up(b8, tm)


def make_mlp_forward(params, *, use_bf16_matmul=False):
    """Pad/pack parameters ONCE and return a jitted fused forward(x) function.

    params: list of (W, b) with W: (fan_in, fan_out) (PyTorch Linear weight, transposed
    to [in, out]) and b: (fan_out,).
    """
    num_layers = len(params)
    dims = [params[0][0].shape[0]] + [w.shape[1] for (w, _) in params]
    input_dim, output_dim = dims[0], dims[-1]

    w_dtype = jnp.bfloat16 if use_bf16_matmul else params[0][0].dtype
    cast_to = jnp.bfloat16 if use_bf16_matmul else None

    # Lane (output-feature) dims are 128-padded; only W0's contraction dim stays at the
    # 8-row sublane multiple (later layers must be 128-row: the activation is 128 lanes).
    pd = [_round_up(dims[0], _SUBLANE)] + [_round_up(d, _LANE) for d in dims[1:]]
    fo_max = max(pd[1:])

    weights_p = []
    for i, (w, _) in enumerate(params):
        w_p = jnp.zeros((pd[i], pd[i + 1]), w_dtype)
        w_p = w_p.at[:dims[i], :dims[i + 1]].set(w.astype(w_dtype))
        weights_p.append(w_p)
    weights_p = tuple(weights_p)

    bias_packed = jnp.zeros((num_layers, 1, fo_max), jnp.float32)
    for i, (_, b) in enumerate(params):
        bias_packed = bias_packed.at[i, 0, :dims[i + 1]].set(b.astype(jnp.float32))

    # ---- generation-aware VMEM / tile caps ----
    vmem_cap = _tpu_vmem_capacity_bytes()
    vmem_budget = int(0.75 * vmem_cap)               # ~48 MiB on v7x, ~96 MiB on v5e/v6e
    tm_cap = 256 if vmem_cap <= 64 * 1024 * 1024 else 512

    param_bytes = (sum(int(w.size) * w.dtype.itemsize for w in weights_p)
                   + int(bias_packed.size) * 4)
    # Cost hints from the ORIGINAL (unpadded) dims.
    ref_flops_per_row = 2 * sum(dims[i] * dims[i + 1] for i in range(num_layers))
    ref_param_bytes = sum(int(w.size) * w.dtype.itemsize + int(b.size) * b.dtype.itemsize
                          for (w, b) in params)

    kernel = functools.partial(_fused_mlp_kernel,
                               out_widths=tuple(pd[1:]), cast_to=cast_to)

    def forward(x):
        batch = x.shape[0]
        assert x.shape[1] == input_dim
        dtype = x.dtype
        itemsize = jnp.dtype(dtype).itemsize
        tm, b_pad = _choose_batch_tiling(batch, tm_cap)

        if b_pad == batch and pd[0] == input_dim:
            x_p = x
        else:
            x_p = jnp.zeros((b_pad, pd[0]), dtype).at[:batch, :input_dim].set(x)

        grid = (b_pad // tm,)
        in_specs = [pl.BlockSpec((tm, pd[0]), lambda i: (i, 0))]
        for w_p in weights_p:
            # Resident (constant index_map) weight block.
            # TODO(synk): add pipeline_mode=pl.Buffered(1) once verified on the target jax
            #             version to drop the unused second buffer of resident weights.
            in_specs.append(pl.BlockSpec(w_p.shape, lambda i: (0, 0)))
        in_specs.append(pl.BlockSpec(bias_packed.shape, lambda i: (0, 0, 0)))
        out_spec = pl.BlockSpec((tm, pd[-1]), lambda i: (i, 0))

        cost = pl.CostEstimate(
            flops=batch * ref_flops_per_row,
            transcendentals=0,
            bytes_accessed=(batch * input_dim * itemsize + ref_param_bytes
                            + batch * output_dim * itemsize),
        )

        # VMEM: double-buffered x/out tiles + resident params (assume double-buffered)
        # + inter-layer f32 activation + margin; clamped to the per-generation budget.
        needed_vmem = (2 * tm * (pd[0] + pd[-1]) * itemsize
                       + 2 * param_bytes
                       + 2 * tm * fo_max * 4
                       + (1 << 20))
        vmem_limit = int(min(vmem_budget, max(needed_vmem, 32 * 1024 * 1024)))

        out_padded = pl.pallas_call(
            kernel,
            out_shape=jax.ShapeDtypeStruct((b_pad, pd[-1]), dtype),
            grid_spec=pltpu.PrefetchScalarGridSpec(
                num_scalar_prefetch=0,
                grid=grid,
                in_specs=in_specs,
                out_specs=out_spec,
            ),
            compiler_params=pltpu.CompilerParams(
                dimension_semantics=("parallel",),   # batch tiles split across TCs (v7x)
                vmem_limit_bytes=vmem_limit,
            ),
            cost_estimate=cost,
        )(x_p, *weights_p, bias_packed)

        return out_padded[:batch, :output_dim]

    return jax.jit(forward)


def init_mlp_params(key, input_dim, hidden_dim, output_dim, num_layers=5,
                    dtype=jnp.float32):
    """Deterministic init matching nn.Linear shapes (W stored transposed: [in, out])."""
    assert num_layers >= 2
    dims = [input_dim] + [hidden_dim] * (num_layers - 1) + [output_dim]
    params = []
    for i in range(num_layers):
        fan_in, fan_out = dims[i], dims[i + 1]
        key, wk, bk = jax.random.split(key, 3)
        bound = 1.0 / jnp.sqrt(fan_in)  # PyTorch default Linear init range
        w = jax.random.uniform(wk, (fan_in, fan_out), dtype, -bound, bound)
        b = jax.random.uniform(bk, (fan_out,), dtype, -bound, bound)
        params.append((w, b))
    return params


def _reference_forward(x, params):
    h = x
    n = len(params)
    for i, (w, b) in enumerate(params):
        h = h @ w + b
        if i != n - 1:
            h = jnp.maximum(h, 0.0)
    return h


if __name__ == "__main__":
    batch = 8
    input_dim = 32
    hidden_dim = 32
    output_dim = 16
    num_layers = 5

    key = jax.random.PRNGKey(0)
    key, xk = jax.random.split(key)
    x = jax.random.normal(xk, (batch, input_dim), dtype=jnp.float32)

    params = init_mlp_params(key, input_dim, hidden_dim, output_dim, num_layers)

    mlp_forward = make_mlp_forward(params)   # pads/packs weights ONCE, returns jitted fn
    out = jax.block_until_ready(mlp_forward(x))

    ref = _reference_forward(x, params)
    assert out.shape == (batch, output_dim), out.shape
    assert jnp.allclose(out, ref, atol=1e-4, rtol=1e-4), "mismatch vs reference"

    print("KERNEL_OK")
</pallas_src>

<mosaic_0001>
module attributes {stable_mosaic.version = 11 : i64} {
  func.func @_fused_mlp_kernel(%arg0: i32, %arg1: memref<8x32xf32, #tpu.memory_space<vmem>>, %arg2: memref<32x128xf32, #tpu.memory_space<vmem>>, %arg3: memref<128x128xf32, #tpu.memory_space<vmem>>, %arg4: memref<128x128xf32, #tpu.memory_space<vmem>>, %arg5: memref<128x128xf32, #tpu.memory_space<vmem>>, %arg6: memref<128x128xf32, #tpu.memory_space<vmem>>, %arg7: memref<5x1x128xf32, #tpu.memory_space<vmem>>, %arg8: memref<8x128xf32, #tpu.memory_space<vmem>>) attributes {dimension_semantics = [#tpu.dimension_semantics<parallel>], iteration_bounds = array<i64: 1>, scalar_prefetch = 0 : i64, scratch_operands = 0 : i64, tpu.core_type = #tpu.core_type<tc>, window_params = [{transform_indices = @transform_0, window_bounds = array<i64: 8, 32>}, {pipeline_mode = #tpu.pipeline_mode<synchronous>, transform_indices = @transform_1, window_bounds = array<i64: 32, 128>}, {pipeline_mode = #tpu.pipeline_mode<synchronous>, transform_indices = @transform_2, window_bounds = array<i64: 128, 128>}, {pipeline_mode = #tpu.pipeline_mode<synchronous>, transform_indices = @transform_3, window_bounds = array<i64: 128, 128>}, {pipeline_mode = #tpu.pipeline_mode<synchronous>, transform_indices = @transform_4, window_bounds = array<i64: 128, 128>}, {pipeline_mode = #tpu.pipeline_mode<synchronous>, transform_indices = @transform_5, window_bounds = array<i64: 128, 128>}, {pipeline_mode = #tpu.pipeline_mode<synchronous>, transform_indices = @transform_6, window_bounds = array<i64: 5, 1, 128>}, {transform_indices = @transform_7, window_bounds = array<i64: 8, 128>}]} {
    %c0 = arith.constant 0 : index
    %c0_0 = arith.constant 0 : index
    %0 = vector.load %arg1[%c0, %c0_0] : memref<8x32xf32, #tpu.memory_space<vmem>>, vector<8x32xf32>
    %c0_1 = arith.constant 0 : index
    %c0_2 = arith.constant 0 : index
    %1 = vector.load %arg2[%c0_1, %c0_2] : memref<32x128xf32, #tpu.memory_space<vmem>>, vector<32x128xf32>
    %cst = arith.constant dense<0.000000e+00> : vector<8x128xf32>
    %2 = tpu.matmul %0, %1, %cst {dimension_numbers = #tpu.dot_dimension_numbers<[1], [0], [0], [1], [0, 0, 1, 1], [], []>} : vector<8x32xf32>, vector<32x128xf32>, vector<8x128xf32> -> vector<8x128xf32>
    %c0_3 = arith.constant 0 : index
    %c0_4 = arith.constant 0 : index
    %c0_5 = arith.constant 0 : index
    %3 = vector.load %arg7[%c0_3, %c0_4, %c0_5] : memref<5x1x128xf32, #tpu.memory_space<vmem>>, vector<1x1x128xf32>
    %4 = vector.shape_cast %3 : vector<1x1x128xf32> to vector<1x128xf32>
    %5 = vector.broadcast %4 : vector<1x128xf32> to vector<8x128xf32>
    %6 = arith.addf %2, %5 : vector<8x128xf32>
    %cst_6 = arith.constant 0.000000e+00 : f32
    %7 = vector.broadcast %cst_6 : f32 to vector<8x128xf32>
    %8 = arith.maximumf %6, %7 : vector<8x128xf32>
    %c0_7 = arith.constant 0 : index
    %c0_8 = arith.constant 0 : index
    %9 = vector.load %arg3[%c0_7, %c0_8] : memref<128x128xf32, #tpu.memory_space<vmem>>, vector<128x128xf32>
    %cst_9 = arith.constant dense<0.000000e+00> : vector<8x128xf32>
    %10 = tpu.matmul %8, %9, %cst_9 {dimension_numbers = #tpu.dot_dimension_numbers<[1], [0], [0], [1], [0, 0, 1, 1], [], []>} : vector<8x128xf32>, vector<128x128xf32>, vector<8x128xf32> -> vector<8x128xf32>
    %c1 = arith.constant 1 : index
    %c0_10 = arith.constant 0 : index
    %c0_11 = arith.constant 0 : index
    %11 = vector.load %arg7[%c1, %c0_10, %c0_11] : memref<5x1x128xf32, #tpu.memory_space<vmem>>, vector<1x1x128xf32>
    %12 = vector.shape_cast %11 : vector<1x1x128xf32> to vector<1x128xf32>
    %13 = vector.broadcast %12 : vector<1x128xf32> to vector<8x128xf32>
    %14 = arith.addf %10, %13 : vector<8x128xf32>
    %cst_12 = arith.constant 0.000000e+00 : f32
    %15 = vector.broadcast %cst_12 : f32 to vector<8x128xf32>
    %16 = arith.maximumf %14, %15 : vector<8x128xf32>
    %c0_13 = arith.constant 0 : index
    %c0_14 = arith.constant 0 : index
    %17 = vector.load %arg4[%c0_13, %c0_14] : memref<128x128xf32, #tpu.memory_space<vmem>>, vector<128x128xf32>
    %cst_15 = arith.constant dense<0.000000e+00> : vector<8x128xf32>
    %18 = tpu.matmul %16, %17, %cst_15 {dimension_numbers = #tpu.dot_dimension_numbers<[1], [0], [0], [1], [0, 0, 1, 1], [], []>} : vector<8x128xf32>, vector<128x128xf32>, vector<8x128xf32> -> vector<8x128xf32>
    %c2 = arith.constant 2 : index
    %c0_16 = arith.constant 0 : index
    %c0_17 = arith.constant 0 : index
    %19 = vector.load %arg7[%c2, %c0_16, %c0_17] : memref<5x1x128xf32, #tpu.memory_space<vmem>>, vector<1x1x128xf32>
    %20 = vector.shape_cast %19 : vector<1x1x128xf32> to vector<1x128xf32>
    %21 = vector.broadcast %20 : vector<1x128xf32> to vector<8x128xf32>
    %22 = arith.addf %18, %21 : vector<8x128xf32>
    %cst_18 = arith.constant 0.000000e+00 : f32
    %23 = vector.broadcast %cst_18 : f32 to vector<8x128xf32>
    %24 = arith.maximumf %22, %23 : vector<8x128xf32>
    %c0_19 = arith.constant 0 : index
    %c0_20 = arith.constant 0 : index
    %25 = vector.load %arg5[%c0_19, %c0_20] : memref<128x128xf32, #tpu.memory_space<vmem>>, vector<128x128xf32>
    %cst_21 = arith.constant dense<0.000000e+00> : vector<8x128xf32>
    %26 = tpu.matmul %24, %25, %cst_21 {dimension_numbers = #tpu.dot_dimension_numbers<[1], [0], [0], [1], [0, 0, 1, 1], [], []>} : vector<8x128xf32>, vector<128x128xf32>, vector<8x128xf32> -> vector<8x128xf32>
    %c3 = arith.constant 3 : index
    %c0_22 = arith.constant 0 : index
    %c0_23 = arith.constant 0 : index
    %27 = vector.load %arg7[%c3, %c0_22, %c0_23] : memref<5x1x128xf32, #tpu.memory_space<vmem>>, vector<1x1x128xf32>
    %28 = vector.shape_cast %27 : vector<1x1x128xf32> to vector<1x128xf32>
    %29 = vector.broadcast %28 : vector<1x128xf32> to vector<8x128xf32>
    %30 = arith.addf %26, %29 : vector<8x128xf32>
    %cst_24 = arith.constant 0.000000e+00 : f32
    %31 = vector.broadcast %cst_24 : f32 to vector<8x128xf32>
    %32 = arith.maximumf %30, %31 : vector<8x128xf32>
    %c0_25 = arith.constant 0 : index
    %c0_26 = arith.constant 0 : index
    %33 = vector.load %arg6[%c0_25, %c0_26] : memref<128x128xf32, #tpu.memory_space<vmem>>, vector<128x128xf32>
    %cst_27 = arith.constant dense<0.000000e+00> : vector<8x128xf32>
    %34 = tpu.matmul %32, %33, %cst_27 {dimension_numbers = #tpu.dot_dimension_numbers<[1], [0], [0], [1], [0, 0, 1, 1], [], []>} : vector<8x128xf32>, vector<128x128xf32>, vector<8x128xf32> -> vector<8x128xf32>
    %c4 = arith.constant 4 : index
    %c0_28 = arith.constant 0 : index
    %c0_29 = arith.constant 0 : index
    %35 = vector.load %arg7[%c4, %c0_28, %c0_29] : memref<5x1x128xf32, #tpu.memory_space<vmem>>, vector<1x1x128xf32>
    %36 = vector.shape_cast %35 : vector<1x1x128xf32> to vector<1x128xf32>
    %37 = vector.broadcast %36 : vector<1x128xf32> to vector<8x128xf32>
    %38 = arith.addf %34, %37 : vector<8x128xf32>
    %c0_30 = arith.constant 0 : index
    %c0_31 = arith.constant 0 : index
    %39 = vector.load %arg8[%c0_30, %c0_31] : memref<8x128xf32, #tpu.memory_space<vmem>>, vector<8x128xf32>
    tpu.vector_store %arg8[%c0_30, %c0_31], %38 {strides = array<i32>} : memref<8x128xf32, #tpu.memory_space<vmem>>, vector<8x128xf32>,
    return
  }
  func.func @transform_0(%arg0: i32) -> (i32, i32) {
    %c0_i32 = arith.constant 0 : i32
    %c0_i32_0 = arith.constant 0 : i32
    return %arg0, %c0_i32 : i32, i32
  }
  func.func @transform_1(%arg0: i32) -> (i32, i32) {
    %c0_i32 = arith.constant 0 : i32
    %c0_i32_0 = arith.constant 0 : i32
    %c0_i32_1 = arith.constant 0 : i32
    return %c0_i32, %c0_i32_0 : i32, i32
  }
  func.func @transform_2(%arg0: i32) -> (i32, i32) {
    %c0_i32 = arith.constant 0 : i32
    %c0_i32_0 = arith.constant 0 : i32
    %c0_i32_1 = arith.constant 0 : i32
    return %c0_i32, %c0_i32_0 : i32, i32
  }
  func.func @transform_3(%arg0: i32) -> (i32, i32) {
    %c0_i32 = arith.constant 0 : i32
    %c0_i32_0 = arith.constant 0 : i32
    %c0_i32_1 = arith.constant 0 : i32
    return %c0_i32, %c0_i32_0 : i32, i32
  }
  func.func @transform_4(%arg0: i32) -> (i32, i32) {
    %c0_i32 = arith.constant 0 : i32
    %c0_i32_0 = arith.constant 0 : i32
    %c0_i32_1 = arith.constant 0 : i32
    return %c0_i32, %c0_i32_0 : i32, i32
  }
  func.func @transform_5(%arg0: i32) -> (i32, i32) {
    %c0_i32 = arith.constant 0 : i32
    %c0_i32_0 = arith.constant 0 : i32
    %c0_i32_1 = arith.constant 0 : i32
    return %c0_i32, %c0_i32_0 : i32, i32
  }
  func.func @transform_6(%arg0: i32) -> (i32, i32, i32) {
    %c0_i32 = arith.constant 0 : i32
    %c0_i32_0 = arith.constant 0 : i32
    %c0_i32_1 = arith.constant 0 : i32
    %c0_i32_2 = arith.constant 0 : i32
    return %c0_i32, %c0_i32_0, %c0_i32_1 : i32, i32, i32
  }
  func.func @transform_7(%arg0: i32) -> (i32, i32) {
    %c0_i32 = arith.constant 0 : i32
    %c0_i32_0 = arith.constant 0 : i32
    return %arg0, %c0_i32 : i32, i32
  }
}

</mosaic_0001>

<llo_original>
// kernel: forward.1
$region0: #{forward.1}
  #allocation0 [shape = 'u32[]', space=smem, size = 0x4, offset = 0x4, fixed_abs, tag = 'smem constant byte address 0x4 - core index']
  #allocation1 [shape = 'u32[144,128]{1,0:T(1,128)}', space=vmem, size = 0x12000, scoped, tag = 'internal scratch']
  %s0 = inlined_call_operand.hbm [shape: f32[8,32], index: 0, kind: input, shape index: {}]
  %s1 = inlined_call_operand.hbm [shape: f32[32,128], index: 1, kind: input, shape index: {}]
  %s2 = inlined_call_operand.hbm [shape: f32[128,128], index: 2, kind: input, shape index: {}]
  %s3 = inlined_call_operand.hbm [shape: f32[128,128], index: 3, kind: input, shape index: {}]
  %s4 = inlined_call_operand.hbm [shape: f32[128,128], index: 4, kind: input, shape index: {}]
  %s5 = inlined_call_operand.hbm [shape: f32[128,128], index: 5, kind: input, shape index: {}]
  %s6 = inlined_call_operand.vmem [shape: f32[5,1,128], index: 6, kind: input, shape index: {}]
  %s7 = inlined_call_operand.hbm [shape: f32[8,128], index: 7, kind: output, shape index: {}]
  %s8 = sld [smem:[#allocation0]]
  $region62: #{forward.1} parent=0
    _
  %s10 = ssub.s32 1, %s8
  %s11 = scalar_select 0, %s10, %s8
  $region1: #{forward.1} parent=0
    #allocation2 [shape = 'u8[4096]{0}', space=vmem, size = 0x1000, scoped, tag = 'input window, operand 0, single buffered']
    #allocation3 [shape = 's32[1]{0}', space=sflag, size = 0x4, scoped, tag = 'scoped memory for forward.1']
    #allocation4 [shape = 's32[1]{0}', space=sflag, size = 0x4, scoped, tag = 'scoped memory for forward.1']
    #allocation5 [shape = 'u8[16384]{0}', space=vmem, size = 0x4000, scoped, tag = 'input window, operand 1, single buffered']
    #allocation6 [shape = 's32[1]{0}', space=sflag, size = 0x4, scoped, tag = 'scoped memory for forward.1']
    #allocation7 [shape = 'u8[65536]{0}', space=vmem, size = 0x10000, scoped, tag = 'input window, operand 2, single buffered']
    #allocation8 [shape = 'u8[65536]{0}', space=vmem, size = 0x10000, scoped, tag = 'input window, operand 3, single buffered']
    #allocation9 [shape = 's32[1]{0}', space=sflag, size = 0x4, scoped, tag = 'scoped memory for forward.1']
    #allocation10 [shape = 'u8[65536]{0}', space=vmem, size = 0x10000, scoped, tag = 'input window, operand 4, single buffered']
    #allocation11 [shape = 'u8[65536]{0}', space=vmem, size = 0x10000, scoped, tag = 'input window, operand 5, single buffered']
    #allocation12 [shape = 's32[1]{0}', space=sflag, size = 0x4, scoped, tag = 'scoped memory for forward.1']
    #allocation13 [shape = 'u8[4096]{0}', space=vmem, size = 0x1000, scoped, tag = 'output window, operand 0, single buffered']
    %12 = vsyncpa [#allocation3], 0
    %13 = vsyncpa [#allocation6], 0
    %14 = vsyncpa [#allocation9], 0
    %15 = vsyncpa [#allocation12], 0
    %16 = vsyncpa [#allocation4], 0
    // Predicated region
    $region2: #{forward.1} parent=1 // pred_check
      _
    $region3: #{forward.1} parent=1 // pred_check_branch
      %18 = sbr.rel (0) target = $region5
    $region4: #{forward.1} parent=1 // pred_region
      %s20 = ssub.s32 128, 128
      %21 = vsyncadd [#allocation3], %s20
      %s23 = sshll.u32 [#allocation2], 4
      %s24 = int_to_ptr.vmem [resolvable:$true] %s23
      %26 = dma.hbm_to_vmem [thread:$0]  %s0, 128, %s24, [#allocation3]
    $region5: #{forward.1} parent=1 // pred_fallthru
      _
    // Predicated region
    $region6: #{forward.1} parent=1 // pred_check
      _
    $region7: #{forward.1} parent=1 // pred_check_branch
      %28 = sbr.rel (0) target = $region9
    $region8: #{forward.1} parent=1 // pred_region
      %s30 = ssub.s32 512, 512
      %31 = vsyncadd [#allocation6], %s30
      %s32 = sshll.u32 [#allocation5], 4
      %s33 = int_to_ptr.vmem [resolvable:$true] %s32
      %38 = dma.hbm_to_vmem [thread:$0]  %s1, 512, %s33, [#allocation6], 128, 128, 8
    $region9: #{forward.1} parent=1 // pred_fallthru
      _
    // Predicated region
    $region10: #{forward.1} parent=1 // pred_check
      _
    $region11: #{forward.1} parent=1 // pred_check_branch
      %40 = sbr.rel (0) target = $region13
    $region12: #{forward.1} parent=1 // pred_region
      %s42 = ssub.s32 2048, 2048
      %43 = vsyncadd [#allocation6], %s42
      %s44 = sshll.u32 [#allocation7], 4
      %s45 = int_to_ptr.vmem [resolvable:$true] %s44
      %50 = dma.hbm_to_vmem [thread:$0]  %s2, 2048, %s45, [#allocation6], 128, 128, 8
    $region13: #{forward.1} parent=1 // pred_fallthru
      _
    // Predicated region
    $region14: #{forward.1} parent=1 // pred_check
      _
    $region15: #{forward.1} parent=1 // pred_check_branch
      %52 = sbr.rel (0) target = $region17
    $region16: #{forward.1} parent=1 // pred_region
      %s54 = ssub.s32 2048, 2048
      %55 = vsyncadd [#allocation9], %s54
      %s56 = sshll.u32 [#allocation8], 4
      %s57 = int_to_ptr.vmem [resolvable:$true] %s56
      %62 = dma.hbm_to_vmem [thread:$0]  %s3, 2048, %s57, [#allocation9], 128, 128, 8
    $region17: #{forward.1} parent=1 // pred_fallthru
      _
    // Predicated region
    $region18: #{forward.1} parent=1 // pred_check
      _
    $region19: #{forward.1} parent=1 // pred_check_branch
      %64 = sbr.rel (0) target = $region21
    $region20: #{forward.1} parent=1 // pred_region
      %s66 = ssub.s32 2048, 2048
      %67 = vsyncadd [#allocation9], %s66
      %s68 = sshll.u32 [#allocation10], 4
      %s69 = int_to_ptr.vmem [resolvable:$true] %s68
      %74 = dma.hbm_to_vmem [thread:$0]  %s4, 2048, %s69, [#allocation9], 128, 128, 8
    $region21: #{forward.1} parent=1 // pred_fallthru
      _
    // Predicated region
    $region22: #{forward.1} parent=1 // pred_check
      _
    $region23: #{forward.1} parent=1 // pred_check_branch
      %76 = sbr.rel (0) target = $region25
    $region24: #{forward.1} parent=1 // pred_region
      %s78 = ssub.s32 2048, 2048
      %79 = vsyncadd [#allocation12], %s78
      %s80 = sshll.u32 [#allocation11], 4
      %s81 = int_to_ptr.vmem [resolvable:$true] %s80
      %86 = dma.hbm_to_vmem [thread:$0]  %s5, 2048, %s81, [#allocation12], 128, 128, 8
    $region25: #{forward.1} parent=1 // pred_fallthru
      _
    // Predicated region
    $region26: #{forward.1} parent=1 // pred_check
      _
    $region27: #{forward.1} parent=1 // pred_check_branch
      %88 = sbr.rel (0) target = $region29
    $region28: #{forward.1} parent=1 // pred_region
      _
    $region29: #{forward.1} parent=1 // pred_fallthru
      _
    // Predicated region
    $region30: #{forward.1} parent=1 // pred_check
      _
    $region31: #{forward.1} parent=1 // pred_check_branch
      %90 = sbr.rel (0) target = $region33
    $region32: #{forward.1} parent=1 // pred_region
      %91 = dma.done [#allocation3], 128
    $region33: #{forward.1} parent=1 // pred_fallthru
      _
    // Predicated region
    $region34: #{forward.1} parent=1 // pred_check
      _
    $region35: #{forward.1} parent=1 // pred_check_branch
      %93 = sbr.rel (0) target = $region37
    $region36: #{forward.1} parent=1 // pred_region
      %94 = dma.done [#allocation6], 512
    $region37: #{forward.1} parent=1 // pred_fallthru
      _
    // Predicated region
    $region38: #{forward.1} parent=1 // pred_check
      _
    $region39: #{forward.1} parent=1 // pred_check_branch
      %96 = sbr.rel (0) target = $region41
    $region40: #{forward.1} parent=1 // pred_region
      %97 = dma.done [#allocation6], 2048
    $region41: #{forward.1} parent=1 // pred_fallthru
      _
    // Predicated region
    $region42: #{forward.1} parent=1 // pred_check
      _
    $region43: #{forward.1} parent=1 // pred_check_branch
      %99 = sbr.rel (0) target = $region45
    $region44: #{forward.1} parent=1 // pred_region
      %100 = dma.done [#allocation9], 2048
    $region45: #{forward.1} parent=1 // pred_fallthru
      _
    // Predicated region
    $region46: #{forward.1} parent=1 // pred_check
      _
    $region47: #{forward.1} parent=1 // pred_check_branch
      %102 = sbr.rel (0) target = $region49
    $region48: #{forward.1} parent=1 // pred_region
      %103 = dma.done [#allocation9], 2048
    $region49: #{forward.1} parent=1 // pred_fallthru
      _
    // Predicated region
    $region50: #{forward.1} parent=1 // pred_check
      _
    $region51: #{forward.1} parent=1 // pred_check_branch
      %105 = sbr.rel (0) target = $region53
    $region52: #{forward.1} parent=1 // pred_region
      %106 = dma.done [#allocation12], 2048
    $region53: #{forward.1} parent=1 // pred_fallthru
      _
    %v107 = vld [vmem:[#allocation2] sm:$0xff]
    %v108 = vld [vmem:[#allocation5] sm:$0xff]
    %v109 = vld [vmem:[#allocation5 + $0x8] sm:$0xff]
    %v110 = vld [vmem:[#allocation5 + $0x10] sm:$0xff]
    %v111 = vld [vmem:[#allocation5 + $0x18] sm:$0xff]
    %v112 = vld [vmem:[%s6] sm:$0x1]
    %v114 = vlaneseq
    %v115 = vshrl.u32 %v114, 7
    %v116 = vsub.s32 0, %v115
    %v117 = vrot.slane %v112, %v116
    %vm119 = vcmask 261120
    %v121 = vsel %vm119, %v107, 0
    %123 = vmatprep.subr.mxu0 0.0
    %124 = vmatpush1.msra.mxu0 %v108
    %125 = vmatprep.subr.mxu0 0.0
    %126 = vmatpush1.msra.mxu0 %v109
    %127 = vmatprep.subr.mxu0 0.0
    %128 = vmatpush1.msra.mxu0 %v110
    %129 = vmatprep.subr.mxu0 0.0
    %130 = vmatpush1.msra.mxu0 %v111
    %131 = vmatprep.subr.mxu0 0.0
    %132 = vmatpush1.msra.mxu0 0.0
    %133 = vmatprep.subr.mxu0 0.0
    %134 = vmatpush1.msra.mxu0 0.0
    %135 = vmatprep.subr.mxu0 0.0
    %136 = vmatpush1.msra.mxu0 0.0
    %137 = vmatprep.subr.mxu0 0.0
    %138 = vmatpush1.msra.mxu0 0.0
    %139 = vmatprep.subr.mxu0 0.0
    %140 = vmatpush1.msra.mxu0 0.0
    %141 = vmatprep.subr.mxu0 0.0
    %142 = vmatpush1.msra.mxu0 0.0
    %143 = vmatprep.subr.mxu0 0.0
    %144 = vmatpush1.msra.mxu0 0.0
    %145 = vmatprep.subr.mxu0 0.0
    %146 = vmatpush1.msra.mxu0 0.0
    %147 = vmatprep.subr.mxu0 0.0
    %148 = vmatpush1.msra.mxu0 0.0
    %149 = vmatprep.subr.mxu0 0.0
    %150 = vmatpush1.msra.mxu0 0.0
    %151 = vmatprep.subr.mxu0 0.0
    %152 = vmatpush1.msra.mxu0 0.0
    %153 = vmatprep.subr.mxu0 0.0
    %154 = vmatpush1.msra.mxu0 0.0
    %155 = vmatprep.subr.mxu0 0.0
    %156 = vmatpush1.msra.mxu0 0.0
    %157 = vmatprep.subr.mxu0 0.0
    %158 = vmatpush1.msra.mxu0 0.0
    %159 = vmatprep.subr.mxu0 0.0
    %160 = vmatpush1.msra.mxu0 0.0
    %161 = vmatprep.subr.mxu0 0.0
    %162 = vmatpush1.msra.mxu0 0.0
    %163 = vmatprep.subr.mxu0 0.0
    %164 = vmatpush1.msra.mxu0 0.0
    %165 = vmatprep.subr.mxu0 0.0
    %166 = vmatpush1.msra.mxu0 0.0
    %167 = vmatprep.subr.mxu0 0.0
    %168 = vmatpush1.msra.mxu0 0.0
    %169 = vmatprep.subr.mxu0 0.0
    %170 = vmatpush1.msra.mxu0 0.0
    %171 = vmatprep.subr.mxu0 0.0
    %172 = vmatpush1.msra.mxu0 0.0
    %173 = vmatprep.subr.mxu0 0.0
    %174 = vmatpush1.msra.mxu0 0.0
    %175 = vmatprep.subr.mxu0 0.0
    %176 = vmatpush1.msra.mxu0 0.0
    %177 = vmatprep.subr.mxu0 0.0
    %178 = vmatpush1.msra.mxu0 0.0
    %179 = vmatprep.subr.mxu0 0.0
    %180 = vmatpush1.msra.mxu0 0.0
    %181 = vmatprep.subr.mxu0 0.0
    %182 = vmatpush1.msra.mxu0 0.0
    %183 = vmatprep.subr.mxu0 0.0
    %184 = vmatpush1.msra.mxu0 0.0
    %185 = vmatprep.subr.mxu0 0.0
    %186 = vmatpush1.msra.mxu0 0.0
    %187 = vmatprep.mubr.f32.mxu0 0.0
    %188 = vmatmul.mubr.f32.gmra.mrb[0].mxu0 %v121
    %v189 = vpop.f32.mrb[0].mxu0
    %v190 = vadd.f32 %v117, %v189
    %v191 = vpop.f32.mrb[0].mxu0
    %192 = vdwg.mxu0
    %v193 = vmax.f32 %v190, 0.0
    %v194 = vld [vmem:[#allocation7] sm:$0xff]
    %v195 = vld [vmem:[#allocation7 + $0x8] sm:$0xff]
    %v196 = vld [vmem:[#allocation7 + $0x10] sm:$0xff]
    %v197 = vld [vmem:[#allocation7 + $0x18] sm:$0xff]
    %v198 = vld [vmem:[#allocation7 + $0x20] sm:$0xff]
    %v199 = vld [vmem:[#allocation7 + $0x28] sm:$0xff]
    %v200 = vld [vmem:[#allocation7 + $0x30] sm:$0xff]
    %v201 = vld [vmem:[#allocation7 + $0x38] sm:$0xff]
    %v202 = vld [vmem:[#allocation7 + $0x40] sm:$0xff]
    %v203 = vld [vmem:[#allocation7 + $0x48] sm:$0xff]
    %v204 = vld [vmem:[#allocation7 + $0x50] sm:$0xff]
    %v205 = vld [vmem:[#allocation7 + $0x58] sm:$0xff]
    %v206 = vld [vmem:[#allocation7 + $0x60] sm:$0xff]
    %v207 = vld [vmem:[#allocation7 + $0x68] sm:$0xff]
    %v208 = vld [vmem:[#allocation7 + $0x70] sm:$0xff]
    %v209 = vld [vmem:[#allocation7 + $0x78] sm:$0xff]
    %s210 = scalar_lea.vmem %s6, 1
    %v211 = vld [vmem:[%s210] sm:$0x1]
    %v213 = vlaneseq
    %v214 = vshrl.u32 %v213, 7
    %v215 = vsub.s32 0, %v214
    %v216 = vrot.slane %v211, %v215
    %218 = vmatprep.subr.mxu0 0.0
    %219 = vmatpush1.msra.mxu0 %v194
    %220 = vmatprep.subr.mxu0 0.0
    %221 = vmatpush1.msra.mxu0 %v195
    %222 = vmatprep.subr.mxu0 0.0
    %223 = vmatpush1.msra.mxu0 %v196
    %224 = vmatprep.subr.mxu0 0.0
    %225 = vmatpush1.msra.mxu0 %v197
    %226 = vmatprep.subr.mxu0 0.0
    %227 = vmatpush1.msra.mxu0 %v198
    %228 = vmatprep.subr.mxu0 0.0
    %229 = vmatpush1.msra.mxu0 %v199
    %230 = vmatprep.subr.mxu0 0.0
    %231 = vmatpush1.msra.mxu0 %v200
    %232 = vmatprep.subr.mxu0 0.0
    %233 = vmatpush1.msra.mxu0 %v201
    %234 = vmatprep.subr.mxu0 0.0
    %235 = vmatpush1.msra.mxu0 %v202
    %236 = vmatprep.subr.mxu0 0.0
    %237 = vmatpush1.msra.mxu0 %v203
    %238 = vmatprep.subr.mxu0 0.0
    %239 = vmatpush1.msra.mxu0 %v204
    %240 = vmatprep.subr.mxu0 0.0
    %241 = vmatpush1.msra.mxu0 %v205
    %242 = vmatprep.subr.mxu0 0.0
    %243 = vmatpush1.msra.mxu0 %v206
    %244 = vmatprep.subr.mxu0 0.0
    %245 = vmatpush1.msra.mxu0 %v207
    %246 = vmatprep.subr.mxu0 0.0
    %247 = vmatpush1.msra.mxu0 %v208
    %248 = vmatprep.subr.mxu0 0.0
    %249 = vmatpush1.msra.mxu0 %v209
    %250 = vmatprep.subr.mxu0 0.0
    %251 = vmatpush1.msra.mxu0 0.0
    %252 = vmatprep.subr.mxu0 0.0
    %253 = vmatpush1.msra.mxu0 0.0
    %254 = vmatprep.subr.mxu0 0.0
    %255 = vmatpush1.msra.mxu0 0.0
    %256 = vmatprep.subr.mxu0 0.0
    %257 = vmatpush1.msra.mxu0 0.0
    %258 = vmatprep.subr.mxu0 0.0
    %259 = vmatpush1.msra.mxu0 0.0
    %260 = vmatprep.subr.mxu0 0.0
    %261 = vmatpush1.msra.mxu0 0.0
    %262 = vmatprep.subr.mxu0 0.0
    %263 = vmatpush1.msra.mxu0 0.0
    %264 = vmatprep.subr.mxu0 0.0
    %265 = vmatpush1.msra.mxu0 0.0
    %266 = vmatprep.subr.mxu0 0.0
    %267 = vmatpush1.msra.mxu0 0.0
    %268 = vmatprep.subr.mxu0 0.0
    %269 = vmatpush1.msra.mxu0 0.0
    %270 = vmatprep.subr.mxu0 0.0
    %271 = vmatpush1.msra.mxu0 0.0
    %272 = vmatprep.subr.mxu0 0.0
    %273 = vmatpush1.msra.mxu0 0.0
    %274 = vmatprep.subr.mxu0 0.0
    %275 = vmatpush1.msra.mxu0 0.0
    %276 = vmatprep.subr.mxu0 0.0
    %277 = vmatpush1.msra.mxu0 0.0
    %278 = vmatprep.subr.mxu0 0.0
    %279 = vmatpush1.msra.mxu0 0.0
    %280 = vmatprep.subr.mxu0 0.0
    %281 = vmatpush1.msra.mxu0 0.0
    %282 = vmatprep.mubr.f32.mxu0 0.0
    %283 = vmatmul.mubr.f32.gmra.mrb[0].mxu0 %v193
    %v284 = vpop.f32.mrb[0].mxu0
    %v285 = vadd.f32 %v216, %v284
    %v286 = vpop.f32.mrb[0].mxu0
    %287 = vdwg.mxu0
    %v288 = vmax.f32 %v285, 0.0
    %v289 = vld [vmem:[#allocation8] sm:$0xff]
    %v290 = vld [vmem:[#allocation8 + $0x8] sm:$0xff]
    %v291 = vld [vmem:[#allocation8 + $0x10] sm:$0xff]
    %v292 = vld [vmem:[#allocation8 + $0x18] sm:$0xff]
    %v293 = vld [vmem:[#allocation8 + $0x20] sm:$0xff]
    %v294 = vld [vmem:[#allocation8 + $0x28] sm:$0xff]
    %v295 = vld [vmem:[#allocation8 + $0x30] sm:$0xff]
    %v296 = vld [vmem:[#allocation8 + $0x38] sm:$0xff]
    %v297 = vld [vmem:[#allocation8 + $0x40] sm:$0xff]
    %v298 = vld [vmem:[#allocation8 + $0x48] sm:$0xff]
    %v299 = vld [vmem:[#allocation8 + $0x50] sm:$0xff]
    %v300 = vld [vmem:[#allocation8 + $0x58] sm:$0xff]
    %v301 = vld [vmem:[#allocation8 + $0x60] sm:$0xff]
    %v302 = vld [vmem:[#allocation8 + $0x68] sm:$0xff]
    %v303 = vld [vmem:[#allocation8 + $0x70] sm:$0xff]
    %v304 = vld [vmem:[#allocation8 + $0x78] sm:$0xff]
    %s305 = scalar_lea.vmem %s6, 2
    %v306 = vld [vmem:[%s305] sm:$0x1]
    %v308 = vlaneseq
    %v309 = vshrl.u32 %v308, 7
    %v310 = vsub.s32 0, %v309
    %v311 = vrot.slane %v306, %v310
    %313 = vmatprep.subr.mxu0 0.0
    %314 = vmatpush1.msra.mxu0 %v289
    %315 = vmatprep.subr.mxu0 0.0
    %316 = vmatpush1.msra.mxu0 %v290
    %317 = vmatprep.subr.mxu0 0.0
    %318 = vmatpush1.msra.mxu0 %v291
    %319 = vmatprep.subr.mxu0 0.0
    %320 = vmatpush1.msra.mxu0 %v292
    %321 = vmatprep.subr.mxu0 0.0
    %322 = vmatpush1.msra.mxu0 %v293
    %323 = vmatprep.subr.mxu0 0.0
    %324 = vmatpush1.msra.mxu0 %v294
    %325 = vmatprep.subr.mxu0 0.0
    %326 = vmatpush1.msra.mxu0 %v295
    %327 = vmatprep.subr.mxu0 0.0
    %328 = vmatpush1.msra.mxu0 %v296
    %329 = vmatprep.subr.mxu0 0.0
    %330 = vmatpush1.msra.mxu0 %v297
    %331 = vmatprep.subr.mxu0 0.0
    %332 = vmatpush1.msra.mxu0 %v298
    %333 = vmatprep.subr.mxu0 0.0
    %334 = vmatpush1.msra.mxu0 %v299
    %335 = vmatprep.subr.mxu0 0.0
    %336 = vmatpush1.msra.mxu0 %v300
    %337 = vmatprep.subr.mxu0 0.0
    %338 = vmatpush1.msra.mxu0 %v301
    %339 = vmatprep.subr.mxu0 0.0
    %340 = vmatpush1.msra.mxu0 %v302
    %341 = vmatprep.subr.mxu0 0.0
    %342 = vmatpush1.msra.mxu0 %v303
    %343 = vmatprep.subr.mxu0 0.0
    %344 = vmatpush1.msra.mxu0 %v304
    %345 = vmatprep.subr.mxu0 0.0
    %346 = vmatpush1.msra.mxu0 0.0
    %347 = vmatprep.subr.mxu0 0.0
    %348 = vmatpush1.msra.mxu0 0.0
    %349 = vmatprep.subr.mxu0 0.0
    %350 = vmatpush1.msra.mxu0 0.0
    %351 = vmatprep.subr.mxu0 0.0
    %352 = vmatpush1.msra.mxu0 0.0
    %353 = vmatprep.subr.mxu0 0.0
    %354 = vmatpush1.msra.mxu0 0.0
    %355 = vmatprep.subr.mxu0 0.0
    %356 = vmatpush1.msra.mxu0 0.0
    %357 = vmatprep.subr.mxu0 0.0
    %358 = vmatpush1.msra.mxu0 0.0
    %359 = vmatprep.subr.mxu0 0.0
    %360 = vmatpush1.msra.mxu0 0.0
    %361 = vmatprep.subr.mxu0 0.0
    %362 = vmatpush1.msra.mxu0 0.0
    %363 = vmatprep.subr.mxu0 0.0
    %364 = vmatpush1.msra.mxu0 0.0
    %365 = vmatprep.subr.mxu0 0.0
    %366 = vmatpush1.msra.mxu0 0.0
    %367 = vmatprep.subr.mxu0 0.0
    %368 = vmatpush1.msra.mxu0 0.0
    %369 = vmatprep.subr.mxu0 0.0
    %370 = vmatpush1.msra.mxu0 0.0
    %371 = vmatprep.subr.mxu0 0.0
    %372 = vmatpush1.msra.mxu0 0.0
    %373 = vmatprep.subr.mxu0 0.0
    %374 = vmatpush1.msra.mxu0 0.0
    %375 = vmatprep.subr.mxu0 0.0
    %376 = vmatpush1.msra.mxu0 0.0
    %377 = vmatprep.mubr.f32.mxu0 0.0
    %378 = vmatmul.mubr.f32.gmra.mrb[0].mxu0 %v288
    %v379 = vpop.f32.mrb[0].mxu0
    %v380 = vadd.f32 %v311, %v379
    %v381 = vpop.f32.mrb[0].mxu0
    %382 = vdwg.mxu0
    %v383 = vmax.f32 %v380, 0.0
    %v384 = vld [vmem:[#allocation10] sm:$0xff]
    %v385 = vld [vmem:[#allocation10 + $0x8] sm:$0xff]
    %v386 = vld [vmem:[#allocation10 + $0x10] sm:$0xff]
    %v387 = vld [vmem:[#allocation10 + $0x18] sm:$0xff]
    %v388 = vld [vmem:[#allocation10 + $0x20] sm:$0xff]
    %v389 = vld [vmem:[#allocation10 + $0x28] sm:$0xff]
    %v390 = vld [vmem:[#allocation10 + $0x30] sm:$0xff]
    %v391 = vld [vmem:[#allocation10 + $0x38] sm:$0xff]
    %v392 = vld [vmem:[#allocation10 + $0x40] sm:$0xff]
    %v393 = vld [vmem:[#allocation10 + $0x48] sm:$0xff]
    %v394 = vld [vmem:[#allocation10 + $0x50] sm:$0xff]
    %v395 = vld [vmem:[#allocation10 + $0x58] sm:$0xff]
    %v396 = vld [vmem:[#allocation10 + $0x60] sm:$0xff]
    %v397 = vld [vmem:[#allocation10 + $0x68] sm:$0xff]
    %v398 = vld [vmem:[#allocation10 + $0x70] sm:$0xff]
    %v399 = vld [vmem:[#allocation10 + $0x78] sm:$0xff]
    %s400 = scalar_lea.vmem %s6, 3
    %v401 = vld [vmem:[%s400] sm:$0x1]
    %v403 = vlaneseq
    %v404 = vshrl.u32 %v403, 7
    %v405 = vsub.s32 0, %v404
    %v406 = vrot.slane %v401, %v405
    %408 = vmatprep.subr.mxu0 0.0
    %409 = vmatpush1.msra.mxu0 %v384
    %410 = vmatprep.subr.mxu0 0.0
    %411 = vmatpush1.msra.mxu0 %v385
    %412 = vmatprep.subr.mxu0 0.0
    %413 = vmatpush1.msra.mxu0 %v386
    %414 = vmatprep.subr.mxu0 0.0
    %415 = vmatpush1.msra.mxu0 %v387
    %416 = vmatprep.subr.mxu0 0.0
    %417 = vmatpush1.msra.mxu0 %v388
    %418 = vmatprep.subr.mxu0 0.0
    %419 = vmatpush1.msra.mxu0 %v389
    %420 = vmatprep.subr.mxu0 0.0
    %421 = vmatpush1.msra.mxu0 %v390
    %422 = vmatprep.subr.mxu0 0.0
    %423 = vmatpush1.msra.mxu0 %v391
    %424 = vmatprep.subr.mxu0 0.0
    %425 = vmatpush1.msra.mxu0 %v392
    %426 = vmatprep.subr.mxu0 0.0
    %427 = vmatpush1.msra.mxu0 %v393
    %428 = vmatprep.subr.mxu0 0.0
    %429 = vmatpush1.msra.mxu0 %v394
    %430 = vmatprep.subr.mxu0 0.0
    %431 = vmatpush1.msra.mxu0 %v395
    %432 = vmatprep.subr.mxu0 0.0
    %433 = vmatpush1.msra.mxu0 %v396
    %434 = vmatprep.subr.mxu0 0.0
    %435 = vmatpush1.msra.mxu0 %v397
    %436 = vmatprep.subr.mxu0 0.0
    %437 = vmatpush1.msra.mxu0 %v398
    %438 = vmatprep.subr.mxu0 0.0
    %439 = vmatpush1.msra.mxu0 %v399
    %440 = vmatprep.subr.mxu0 0.0
    %441 = vmatpush1.msra.mxu0 0.0
    %442 = vmatprep.subr.mxu0 0.0
    %443 = vmatpush1.msra.mxu0 0.0
    %444 = vmatprep.subr.mxu0 0.0
    %445 = vmatpush1.msra.mxu0 0.0
    %446 = vmatprep.subr.mxu0 0.0
    %447 = vmatpush1.msra.mxu0 0.0
    %448 = vmatprep.subr.mxu0 0.0
    %449 = vmatpush1.msra.mxu0 0.0
    %450 = vmatprep.subr.mxu0 0.0
    %451 = vmatpush1.msra.mxu0 0.0
    %452 = vmatprep.subr.mxu0 0.0
    %453 = vmatpush1.msra.mxu0 0.0
    %454 = vmatprep.subr.mxu0 0.0
    %455 = vmatpush1.msra.mxu0 0.0
    %456 = vmatprep.subr.mxu0 0.0
    %457 = vmatpush1.msra.mxu0 0.0
    %458 = vmatprep.subr.mxu0 0.0
    %459 = vmatpush1.msra.mxu0 0.0
    %460 = vmatprep.subr.mxu0 0.0
    %461 = vmatpush1.msra.mxu0 0.0
    %462 = vmatprep.subr.mxu0 0.0
    %463 = vmatpush1.msra.mxu0 0.0
    %464 = vmatprep.subr.mxu0 0.0
    %465 = vmatpush1.msra.mxu0 0.0
    %466 = vmatprep.subr.mxu0 0.0
    %467 = vmatpush1.msra.mxu0 0.0
    %468 = vmatprep.subr.mxu0 0.0
    %469 = vmatpush1.msra.mxu0 0.0
    %470 = vmatprep.subr.mxu0 0.0
    %471 = vmatpush1.msra.mxu0 0.0
    %472 = vmatprep.mubr.f32.mxu0 0.0
    %473 = vmatmul.mubr.f32.gmra.mrb[0].mxu0 %v383
    %v474 = vpop.f32.mrb[0].mxu0
    %v475 = vadd.f32 %v406, %v474
    %v476 = vpop.f32.mrb[0].mxu0
    %477 = vdwg.mxu0
    %v478 = vmax.f32 %v475, 0.0
    %v479 = vld [vmem:[#allocation11] sm:$0xff]
    %v480 = vld [vmem:[#allocation11 + $0x8] sm:$0xff]
    %v481 = vld [vmem:[#allocation11 + $0x10] sm:$0xff]
    %v482 = vld [vmem:[#allocation11 + $0x18] sm:$0xff]
    %v483 = vld [vmem:[#allocation11 + $0x20] sm:$0xff]
    %v484 = vld [vmem:[#allocation11 + $0x28] sm:$0xff]
    %v485 = vld [vmem:[#allocation11 + $0x30] sm:$0xff]
    %v486 = vld [vmem:[#allocation11 + $0x38] sm:$0xff]
    %v487 = vld [vmem:[#allocation11 + $0x40] sm:$0xff]
    %v488 = vld [vmem:[#allocation11 + $0x48] sm:$0xff]
    %v489 = vld [vmem:[#allocation11 + $0x50] sm:$0xff]
    %v490 = vld [vmem:[#allocation11 + $0x58] sm:$0xff]
    %v491 = vld [vmem:[#allocation11 + $0x60] sm:$0xff]
    %v492 = vld [vmem:[#allocation11 + $0x68] sm:$0xff]
    %v493 = vld [vmem:[#allocation11 + $0x70] sm:$0xff]
    %v494 = vld [vmem:[#allocation11 + $0x78] sm:$0xff]
    %s495 = scalar_lea.vmem %s6, 4
    %v496 = vld [vmem:[%s495] sm:$0x1]
    %v498 = vlaneseq
    %v499 = vshrl.u32 %v498, 7
    %v500 = vsub.s32 0, %v499
    %v501 = vrot.slane %v496, %v500
    %503 = vmatprep.subr.mxu0 0.0
    %504 = vmatpush1.msra.mxu0 %v479
    %505 = vmatprep.subr.mxu0 0.0
    %506 = vmatpush1.msra.mxu0 %v480
    %507 = vmatprep.subr.mxu0 0.0
    %508 = vmatpush1.msra.mxu0 %v481
    %509 = vmatprep.subr.mxu0 0.0
    %510 = vmatpush1.msra.mxu0 %v482
    %511 = vmatprep.subr.mxu0 0.0
    %512 = vmatpush1.msra.mxu0 %v483
    %513 = vmatprep.subr.mxu0 0.0
    %514 = vmatpush1.msra.mxu0 %v484
    %515 = vmatprep.subr.mxu0 0.0
    %516 = vmatpush1.msra.mxu0 %v485
    %517 = vmatprep.subr.mxu0 0.0
    %518 = vmatpush1.msra.mxu0 %v486
    %519 = vmatprep.subr.mxu0 0.0
    %520 = vmatpush1.msra.mxu0 %v487
    %521 = vmatprep.subr.mxu0 0.0
    %522 = vmatpush1.msra.mxu0 %v488
    %523 = vmatprep.subr.mxu0 0.0
    %524 = vmatpush1.msra.mxu0 %v489
    %525 = vmatprep.subr.mxu0 0.0
    %526 = vmatpush1.msra.mxu0 %v490
    %527 = vmatprep.subr.mxu0 0.0
    %528 = vmatpush1.msra.mxu0 %v491
    %529 = vmatprep.subr.mxu0 0.0
    %530 = vmatpush1.msra.mxu0 %v492
    %531 = vmatprep.subr.mxu0 0.0
    %532 = vmatpush1.msra.mxu0 %v493
    %533 = vmatprep.subr.mxu0 0.0
    %534 = vmatpush1.msra.mxu0 %v494
    %535 = vmatprep.subr.mxu0 0.0
    %536 = vmatpush1.msra.mxu0 0.0
    %537 = vmatprep.subr.mxu0 0.0
    %538 = vmatpush1.msra.mxu0 0.0
    %539 = vmatprep.subr.mxu0 0.0
    %540 = vmatpush1.msra.mxu0 0.0
    %541 = vmatprep.subr.mxu0 0.0
    %542 = vmatpush1.msra.mxu0 0.0
    %543 = vmatprep.subr.mxu0 0.0
    %544 = vmatpush1.msra.mxu0 0.0
    %545 = vmatprep.subr.mxu0 0.0
    %546 = vmatpush1.msra.mxu0 0.0
    %547 = vmatprep.subr.mxu0 0.0
    %548 = vmatpush1.msra.mxu0 0.0
    %549 = vmatprep.subr.mxu0 0.0
    %550 = vmatpush1.msra.mxu0 0.0
    %551 = vmatprep.subr.mxu0 0.0
    %552 = vmatpush1.msra.mxu0 0.0
    %553 = vmatprep.subr.mxu0 0.0
    %554 = vmatpush1.msra.mxu0 0.0
    %555 = vmatprep.subr.mxu0 0.0
    %556 = vmatpush1.msra.mxu0 0.0
    %557 = vmatprep.subr.mxu0 0.0
    %558 = vmatpush1.msra.mxu0 0.0
    %559 = vmatprep.subr.mxu0 0.0
    %560 = vmatpush1.msra.mxu0 0.0
    %561 = vmatprep.subr.mxu0 0.0
    %562 = vmatpush1.msra.mxu0 0.0
    %563 = vmatprep.subr.mxu0 0.0
    %564 = vmatpush1.msra.mxu0 0.0
    %565 = vmatprep.subr.mxu0 0.0
    %566 = vmatpush1.msra.mxu0 0.0
    %567 = vmatprep.mubr.f32.mxu0 0.0
    %568 = vmatmul.mubr.f32.gmra.mrb[0].mxu0 %v478
    %v569 = vpop.f32.mrb[0].mxu0
    %v570 = vadd.f32 %v501, %v569
    %v571 = vpop.f32.mrb[0].mxu0
    %572 = vdwg.mxu0
    %573 = vst [vmem:[#allocation13] sm:$0xff] %v570
    // Predicated region
    $region54: #{forward.1} parent=1 // pred_check
      _
    $region55: #{forward.1} parent=1 // pred_check_branch
      %575 = sbr.rel (0) target = $region57
    $region56: #{forward.1} parent=1 // pred_region
      %s577 = ssub.s32 128, 128
      %578 = vsyncadd [#allocation4], %s577
      %s580 = sshll.u32 [#allocation13], 4
      %s581 = int_to_ptr.vmem [resolvable:$true] %s580
      %583 = dma.vmem_to_hbm [thread:$0]  %s581, 128, %s7, [#allocation4]
    $region57: #{forward.1} parent=1 // pred_fallthru
      _
    // Predicated region
    $region58: #{forward.1} parent=1 // pred_check
      _
    $region59: #{forward.1} parent=1 // pred_check_branch
      %585 = sbr.rel (0) target = $region61
    $region60: #{forward.1} parent=1 // pred_region
      %586 = dma.done [#allocation4], 128
    $region61: #{forward.1} parent=1 // pred_fallthru
      _
    %587 = vsyncpa [#allocation3], 1
    %588 = vsyncpa [#allocation6], 1
    %589 = vsyncpa [#allocation9], 1
    %590 = vsyncpa [#allocation12], 1
    %591 = vsyncpa [#allocation4], 1

</llo_original>
